<compile_context>
chip_gen: v7x
topology: tpu7x:2x2x1
jax: 0.10.0
libtpu: 0.0.40
codegen_flags: <defaults>
</compile_context>

<pallas_src>
import functools

import jax
import jax.numpy as jnp
from jax.experimental import pallas as pl
from jax.experimental.pallas import tpu as pltpu


def _weighted_reg_loss_kernel(pred_ref, gt_ref, mask_ref, out_ref,
                              acc_loss_ref, acc_mask_ref,
                              *, true_s, block_s, ragged):
    s = pl.program_id(1)

    @pl.when(s == 0)
    def _():
        acc_loss_ref[...] = jnp.zeros_like(acc_loss_ref)
        acc_mask_ref[...] = jnp.zeros_like(acc_mask_ref)

    # Upcast in-kernel; inputs stream in native dtype.
    d = pred_ref[...].astype(jnp.float32) - gt_ref[...].astype(jnp.float32)
    m = mask_ref[...].astype(jnp.float32)                    # (1, block_s)

    # Channel pre-sum (XLU sublane reduce) before touching the accumulator:
    # one accumulator RMW and one mask multiply per block, not per channel.
    sq = jnp.sum(d * d, axis=0, keepdims=True)               # (1, block_s)

    if ragged:
        # Last s-block reads past the true extent; that region is garbage in
        # VMEM (and may be NaN/Inf as f32), so select with where, never rely
        # on multiplying by a zero mask.
        col = (jax.lax.broadcasted_iota(jnp.int32, (1, block_s), 1)
               + s * block_s)
        valid = col < true_s
        acc_loss_ref[...] += jnp.where(valid, sq * m, 0.0)
        acc_mask_ref[...] += jnp.where(valid, m, 0.0)
    else:
        acc_loss_ref[...] += sq * m
        acc_mask_ref[...] += m

    @pl.when(s == pl.num_programs(1) - 1)
    def _():
        # Single cross-lane reduction per batch element, only in the epilogue.
        loss_sum = jnp.sum(acc_loss_ref[...])
        mask_sum = jnp.sum(acc_mask_ref[...])
        row = jax.lax.broadcasted_iota(jnp.int32, (8, 128), 0)
        col = jax.lax.broadcasted_iota(jnp.int32, (8, 128), 1)
        out_ref[...] = jnp.where(
            (row == 0) & (col == 0), loss_sum,
            jnp.where((row == 1) & (col == 0), mask_sum, 0.0))


def weighted_reg_loss(pred, gt, mask, *,
                      target_block_bytes=2 * 1024 * 1024,
                      vmem_budget_bytes=24 * 1024 * 1024):
    """pred, gt: [B, C, H, W]; mask: [B, H, W]. Returns scalar f32 loss."""
    assert pred.shape == gt.shape
    B, C, H, W = pred.shape
    assert mask.shape == (B, H, W)
    S = H * W

    # Pure metadata reshapes (contiguous) -- no HBM copies, no padding.
    pred3 = pred.reshape(B, C, S)
    gt3 = gt.reshape(B, C, S)
    mask3 = mask.reshape(B, 1, S)

    itemsize = jnp.dtype(pred.dtype).itemsize
    m_itemsize = jnp.dtype(mask.dtype).itemsize

    # Pick block_S (multiple of 128): ~target_block_bytes per pred/gt block,
    # capped so the double-buffered VMEM footprint
    #   (2 inputs x 2 bufs x C x block_S + 2 x mask block + 2 f32 accumulators)
    # stays inside the budget, and never wider than the (ceil-128) row extent.
    bytes_per_col = 128 * (4 * C * itemsize + 2 * m_itemsize + 2 * 4)
    target_cols = max(1, target_block_bytes // max(1, C * itemsize * 128))
    max_cols = max(1, vmem_budget_bytes // bytes_per_col)
    cols = min(target_cols, max_cols, pl.cdiv(S, 128))
    block_s = cols * 128
    s_blocks = pl.cdiv(S, block_s)
    ragged = (S % block_s) != 0

    kernel = functools.partial(
        _weighted_reg_loss_kernel,
        true_s=S, block_s=block_s, ragged=ragged)

    grid = (B, s_blocks)

    # Channel axis folded into the block; mask tile shared across channels
    # inside the kernel via broadcast (no channel-expanded mask anywhere).
    pg_spec = pl.BlockSpec((None, C, block_s), lambda b, s: (b, 0, s))
    m_spec = pl.BlockSpec((None, 1, block_s), lambda b, s: (b, 0, s))
    # Lane-dense per-batch partial-sum slab: [0,0]=sum((pred-gt)^2*mask),
    # [1,0]=sum(mask).  Distinct block per b -> safe with B "parallel".
    out_spec = pl.BlockSpec((None, 8, 128), lambda b, s: (b, 0, 0))

    n = B * C * S
    cost = pl.CostEstimate(
        flops=4 * n,
        transcendentals=0,
        bytes_accessed=2 * n * itemsize + B * S * m_itemsize + B * 8 * 128 * 4)

    partials = pl.pallas_call(
        kernel,
        out_shape=jax.ShapeDtypeStruct((B, 8, 128), jnp.float32),
        grid=grid,
        in_specs=[pg_spec, pg_spec, m_spec],
        out_specs=out_spec,
        scratch_shapes=[pltpu.VMEM((1, block_s), jnp.float32),   # loss acc
                        pltpu.VMEM((1, block_s), jnp.float32)],  # mask acc
        compiler_params=pltpu.CompilerParams(
            dimension_semantics=("parallel", "arbitrary"),
            vmem_limit_bytes=32 * 1024 * 1024),
        cost_estimate=cost,
    )(pred3, gt3, mask3)

    num = jnp.sum(partials[:, 0, 0])
    # sum(mask_expanded) == C * sum(mask); torch clamps the denom at 1.
    denom = jnp.maximum(jnp.sum(partials[:, 1, 0]) * C, 1.0)
    return num / denom


if __name__ == "__main__":
    key = jax.random.PRNGKey(0)
    k1, k2, k3 = jax.random.split(key, 3)

    B, C, H, W = 2, 4, 16, 16
    pred = jax.random.normal(k1, (B, C, H, W), dtype=jnp.float32)
    gt = jax.random.normal(k2, (B, C, H, W), dtype=jnp.float32)
    mask = (jax.random.uniform(k3, (B, H, W)) > 0.5).astype(jnp.float32)

    loss = weighted_reg_loss(pred, gt, mask)
    loss = jax.block_until_ready(loss)

    # Pure-JAX reference for correctness check.
    mask_e = jnp.broadcast_to(mask[:, None, :, :], pred.shape)
    denom = jnp.maximum(mask_e.sum(), 1.0)
    ref = (((pred - gt) ** 2) * mask_e).sum() / denom

    assert jnp.allclose(loss, ref, rtol=1e-5, atol=1e-5), (loss, ref)
    print("KERNEL_OK")
</pallas_src>

<mosaic_0001>
module attributes {stable_mosaic.version = 11 : i64} {
  func.func @_weighted_reg_loss_kernel(%arg0: i32, %arg1: i32, %arg2: memref<1x4x256xf32, #tpu.memory_space<vmem>>, %arg3: memref<1x4x256xf32, #tpu.memory_space<vmem>>, %arg4: memref<1x1x256xf32, #tpu.memory_space<vmem>>, %arg5: memref<1x8x128xf32, #tpu.memory_space<vmem>>, %arg6: memref<1x256xf32, #tpu.memory_space<vmem>>, %arg7: memref<1x256xf32, #tpu.memory_space<vmem>>) attributes {dimension_semantics = [#tpu.dimension_semantics<parallel>, #tpu.dimension_semantics<arbitrary>], iteration_bounds = array<i64: 2, 1>, scalar_prefetch = 0 : i64, scratch_operands = 2 : i64, tpu.core_type = #tpu.core_type<tc>, window_params = [{transform_indices = @transform_0, window_bounds = array<i64: 1, 4, 256>}, {transform_indices = @transform_1, window_bounds = array<i64: 1, 4, 256>}, {transform_indices = @transform_2, window_bounds = array<i64: 1, 1, 256>}, {transform_indices = @transform_3, window_bounds = array<i64: 1, 8, 128>}]} {
    %c0_i32 = arith.constant 0 : i32
    %0 = arith.cmpi eq, %arg1, %c0_i32 : i32
    %1 = arith.extui %0 : i1 to i32
    %c0_i32_0 = arith.constant 0 : i32
    %2 = arith.cmpi ne, %1, %c0_i32_0 : i32
    scf.if %2 {
      %cst_19 = arith.constant 0.000000e+00 : f32
      %23 = vector.broadcast %cst_19 : f32 to vector<1x256xf32>
      %c0_20 = arith.constant 0 : index
      %c0_21 = arith.constant 0 : index
      %24 = vector.load %arg6[%c0_20, %c0_21] : memref<1x256xf32, #tpu.memory_space<vmem>>, vector<1x256xf32>
      tpu.vector_store %arg6[%c0_20, %c0_21], %23 {strides = array<i32>} : memref<1x256xf32, #tpu.memory_space<vmem>>, vector<1x256xf32>,
      %cst_22 = arith.constant 0.000000e+00 : f32
      %25 = vector.broadcast %cst_22 : f32 to vector<1x256xf32>
      %c0_23 = arith.constant 0 : index
      %c0_24 = arith.constant 0 : index
      %26 = vector.load %arg7[%c0_23, %c0_24] : memref<1x256xf32, #tpu.memory_space<vmem>>, vector<1x256xf32>
      tpu.vector_store %arg7[%c0_23, %c0_24], %25 {strides = array<i32>} : memref<1x256xf32, #tpu.memory_space<vmem>>, vector<1x256xf32>,
    } else {
    }
    %c0 = arith.constant 0 : index
    %c0_1 = arith.constant 0 : index
    %c0_2 = arith.constant 0 : index
    %3 = vector.load %arg2[%c0, %c0_1, %c0_2] : memref<1x4x256xf32, #tpu.memory_space<vmem>>, vector<1x4x256xf32>
    %4 = vector.shape_cast %3 : vector<1x4x256xf32> to vector<4x256xf32>
    %c0_3 = arith.constant 0 : index
    %c0_4 = arith.constant 0 : index
    %c0_5 = arith.constant 0 : index
    %5 = vector.load %arg3[%c0_3, %c0_4, %c0_5] : memref<1x4x256xf32, #tpu.memory_space<vmem>>, vector<1x4x256xf32>
    %6 = vector.shape_cast %5 : vector<1x4x256xf32> to vector<4x256xf32>
    %7 = arith.subf %4, %6 : vector<4x256xf32>
    %c0_6 = arith.constant 0 : index
    %c0_7 = arith.constant 0 : index
    %c0_8 = arith.constant 0 : index
    %8 = vector.load %arg4[%c0_6, %c0_7, %c0_8] : memref<1x1x256xf32, #tpu.memory_space<vmem>>, vector<1x1x256xf32>
    %9 = vector.shape_cast %8 : vector<1x1x256xf32> to vector<1x256xf32>
    %10 = arith.mulf %7, %7 : vector<4x256xf32>
    %cst = arith.constant dense<0.000000e+00> : vector<256xf32>
    %11 = vector.multi_reduction <add>, %10, %cst [0] : vector<4x256xf32> to vector<256xf32>
    %12 = vector.shape_cast %11 : vector<256xf32> to vector<1x256xf32>
    %c0_9 = arith.constant 0 : index
    %c0_10 = arith.constant 0 : index
    %13 = vector.load %arg6[%c0_9, %c0_10] : memref<1x256xf32, #tpu.memory_space<vmem>>, vector<1x256xf32>
    %14 = arith.mulf %12, %9 : vector<1x256xf32>
    %15 = arith.addf %13, %14 : vector<1x256xf32>
    %c0_11 = arith.constant 0 : index
    %c0_12 = arith.constant 0 : index
    %16 = vector.load %arg6[%c0_11, %c0_12] : memref<1x256xf32, #tpu.memory_space<vmem>>, vector<1x256xf32>
    tpu.vector_store %arg6[%c0_11, %c0_12], %15 {strides = array<i32>} : memref<1x256xf32, #tpu.memory_space<vmem>>, vector<1x256xf32>,
    %c0_13 = arith.constant 0 : index
    %c0_14 = arith.constant 0 : index
    %17 = vector.load %arg7[%c0_13, %c0_14] : memref<1x256xf32, #tpu.memory_space<vmem>>, vector<1x256xf32>
    %18 = arith.addf %17, %9 : vector<1x256xf32>
    %c0_15 = arith.constant 0 : index
    %c0_16 = arith.constant 0 : index
    %19 = vector.load %arg7[%c0_15, %c0_16] : memref<1x256xf32, #tpu.memory_space<vmem>>, vector<1x256xf32>
    tpu.vector_store %arg7[%c0_15, %c0_16], %18 {strides = array<i32>} : memref<1x256xf32, #tpu.memory_space<vmem>>, vector<1x256xf32>,
    %c0_i32_17 = arith.constant 0 : i32
    %20 = arith.cmpi eq, %arg1, %c0_i32_17 : i32
    %21 = arith.extui %20 : i1 to i32
    %c0_i32_18 = arith.constant 0 : i32
    %22 = arith.cmpi ne, %21, %c0_i32_18 : i32
    scf.if %22 {
      %c0_19 = arith.constant 0 : index
      %c0_20 = arith.constant 0 : index
      %23 = vector.load %arg6[%c0_19, %c0_20] : memref<1x256xf32, #tpu.memory_space<vmem>>, vector<1x256xf32>
      %24 = vector.shape_cast %23 : vector<1x256xf32> to vector<1x1x256xf32>
      %cst_21 = arith.constant dense<0.000000e+00> : vector<1xf32>
      %25 = vector.multi_reduction <add>, %24, %cst_21 [1, 2] : vector<1x1x256xf32> to vector<1xf32>
      %26 = vector.shape_cast %25 : vector<1xf32> to vector<1x1x1xf32>
      %27 = vector.extract %26[0, 0, 0] : f32 from vector<1x1x1xf32>
      %c0_22 = arith.constant 0 : index
      %c0_23 = arith.constant 0 : index
      %28 = vector.load %arg7[%c0_22, %c0_23] : memref<1x256xf32, #tpu.memory_space<vmem>>, vector<1x256xf32>
      %29 = vector.shape_cast %28 : vector<1x256xf32> to vector<1x1x256xf32>
      %cst_24 = arith.constant dense<0.000000e+00> : vector<1xf32>
      %30 = vector.multi_reduction <add>, %29, %cst_24 [1, 2] : vector<1x1x256xf32> to vector<1xf32>
      %31 = vector.shape_cast %30 : vector<1xf32> to vector<1x1x1xf32>
      %32 = vector.extract %31[0, 0, 0] : f32 from vector<1x1x1xf32>
      %33 = tpu.iota {dimensions = array<i32: 0>} : vector<8x128xi32>
      %34 = tpu.iota {dimensions = array<i32: 1>} : vector<8x128xi32>
      %c0_i32_25 = arith.constant 0 : i32
      %35 = vector.broadcast %c0_i32_25 : i32 to vector<8x128xi32>
      %36 = arith.cmpi eq, %33, %35 : vector<8x128xi32>
      %c0_i32_26 = arith.constant 0 : i32
      %37 = vector.broadcast %c0_i32_26 : i32 to vector<8x128xi32>
      %38 = arith.cmpi eq, %34, %37 : vector<8x128xi32>
      %39 = arith.andi %36, %38 : vector<8x128xi1>
      %c1_i32 = arith.constant 1 : i32
      %40 = vector.broadcast %c1_i32 : i32 to vector<8x128xi32>
      %41 = arith.cmpi eq, %33, %40 : vector<8x128xi32>
      %c0_i32_27 = arith.constant 0 : i32
      %42 = vector.broadcast %c0_i32_27 : i32 to vector<8x128xi32>
      %43 = arith.cmpi eq, %34, %42 : vector<8x128xi32>
      %44 = arith.andi %41, %43 : vector<8x128xi1>
      %cst_28 = arith.constant 0.000000e+00 : f32
      %45 = vector.broadcast %32 : f32 to vector<8x128xf32>
      %46 = vector.broadcast %cst_28 : f32 to vector<8x128xf32>
      %47 = arith.select %44, %45, %46 : vector<8x128xi1>, vector<8x128xf32>
      %48 = vector.broadcast %27 : f32 to vector<8x128xf32>
      %49 = arith.select %39, %48, %47 : vector<8x128xi1>, vector<8x128xf32>
      %c0_29 = arith.constant 0 : index
      %c0_30 = arith.constant 0 : index
      %c0_31 = arith.constant 0 : index
      %50 = vector.load %arg5[%c0_29, %c0_30, %c0_31] : memref<1x8x128xf32, #tpu.memory_space<vmem>>, vector<1x8x128xf32>
      %51 = vector.shape_cast %50 : vector<1x8x128xf32> to vector<8x128xf32>
      %52 = vector.shape_cast %49 : vector<8x128xf32> to vector<1x8x128xf32>
      tpu.vector_store %arg5[%c0_29, %c0_30, %c0_31], %52 {strides = array<i32>} : memref<1x8x128xf32, #tpu.memory_space<vmem>>, vector<1x8x128xf32>,
    } else {
    }
    return
  }
  func.func @transform_0(%arg0: i32, %arg1: i32) -> (i32, i32, i32) {
    %c0_i32 = arith.constant 0 : i32
    %c0_i32_0 = arith.constant 0 : i32
    return %arg0, %c0_i32, %arg1 : i32, i32, i32
  }
  func.func @transform_1(%arg0: i32, %arg1: i32) -> (i32, i32, i32) {
    %c0_i32 = arith.constant 0 : i32
    %c0_i32_0 = arith.constant 0 : i32
    return %arg0, %c0_i32, %arg1 : i32, i32, i32
  }
  func.func @transform_2(%arg0: i32, %arg1: i32) -> (i32, i32, i32) {
    %c0_i32 = arith.constant 0 : i32
    %c0_i32_0 = arith.constant 0 : i32
    return %arg0, %c0_i32, %arg1 : i32, i32, i32
  }
  func.func @transform_3(%arg0: i32, %arg1: i32) -> (i32, i32, i32) {
    %c0_i32 = arith.constant 0 : i32
    %c0_i32_0 = arith.constant 0 : i32
    %c0_i32_1 = arith.constant 0 : i32
    return %arg0, %c0_i32, %c0_i32_0 : i32, i32, i32
  }
}

</mosaic_0001>

<llo_original>
// kernel: tpu_custom_call.1
$region0: #{tpu_custom_call.1}
  #allocation0 [shape = 'u32[]', space=smem, size = 0x4, offset = 0x4, fixed_abs, tag = 'smem constant byte address 0x4 - core index']
  #allocation1 [shape = 'u32[144,128]{1,0:T(1,128)}', space=vmem, size = 0x12000, scoped, tag = 'internal scratch']
  #allocation2 [shape = 'f32[1,256]{1,0:T(1,128)}', space=vmem, size = 0x400, scoped, tag = 'scratch operand']
  #allocation3 [shape = 'f32[1,256]{1,0:T(1,128)}', space=vmem, size = 0x400, scoped, tag = 'scratch operand']
  %s0 = inlined_call_operand.hbm [shape: f32[2,4,256], index: 0, kind: input, shape index: {}]
  %s1 = inlined_call_operand.hbm [shape: f32[2,4,256], index: 1, kind: input, shape index: {}]
  %s2 = inlined_call_operand.vmem [shape: f32[2,1,256], index: 2, kind: input, shape index: {}]
  %s3 = inlined_call_operand.hbm [shape: f32[2,8,128], index: 3, kind: output, shape index: {}]
  %s4 = sld [smem:[#allocation0]]
  $region61: #{tpu_custom_call.1} parent=0
    _
  %s6 = ssub.s32 1, %s4
  %s7 = scalar_select 0, %s6, %s4
  $region1: #{tpu_custom_call.1} parent=0
    #allocation4 [shape = 'u8[8192]{0}', space=vmem, size = 0x2000, scoped, tag = 'input window, operand 0']
    #allocation5 [shape = 's32[2]{0}', space=sflag, size = 0x8, scoped, tag = 'scoped memory for tpu_custom_call.1']
    #allocation6 [shape = 's32[2]{0}', space=sflag, size = 0x8, scoped, tag = 'scoped memory for tpu_custom_call.1']
    #allocation7 [shape = 'u8[8192]{0}', space=vmem, size = 0x2000, scoped, tag = 'input window, operand 1']
    #allocation8 [shape = 's32[2]{0}', space=sflag, size = 0x8, scoped, tag = 'scoped memory for tpu_custom_call.1']
    #allocation9 [shape = 'u8[8192]{0}', space=vmem, size = 0x2000, scoped, tag = 'output window, operand 0']
    %8 = vsyncpa [#allocation5], 0
    %s9 = scalar_lea.sflag [#allocation5], 1
    %10 = vsyncpa %s9, 0
    %11 = vsyncpa [#allocation8], 0
    %s12 = scalar_lea.sflag [#allocation8], 1
    %13 = vsyncpa %s12, 0
    %14 = vsyncpa [#allocation6], 0
    %s15 = scalar_lea.sflag [#allocation6], 1
    %16 = vsyncpa %s15, 0
    loop: start=0, step=1, limit=4
    $region2: #{tpu_custom_call.1} parent=1 // loop_pre_header
      _
    $region3: #{tpu_custom_call.1} parent=1 // loop_header
      %s18 = sphi 0, %s22
      %p19 = scmp.ge.s32.totalorder %s18, 4
      %s25 = sphi 0, %s37
      %s26 = sphi 0, %s33
      %s27 = sphi 0, %s25
      %s28 = sphi 0, %s26
      %s29 = sphi 0, %s27
      %s30 = sphi 0, %s28
      %s42 = sphi 0, %s44
      %s45 = sphi 0, %s42
      %s46 = sphi 0, %s45
      %s62 = sphi 0, %s46
      %s70 = sphi 0, %s72
      %s73 = sphi 0, %s70
      %s74 = sphi 0, %s73
      %s90 = sphi 0, %s74
      %s98 = sphi 0, %s100
      %s101 = sphi 0, %s98
      %s102 = sphi 0, %s101
      %s118 = sphi 0, %s102
      %s124 = sphi 0, %s126
      %s127 = sphi 0, %s124
      %s128 = sphi 0, %s127
      %s144 = sphi 0, %s128
    $region4: #{tpu_custom_call.1} parent=1 // loop_header_branch
      %21 = sbr.rel (%p19) target = $region8
    $region5: #{tpu_custom_call.1} parent=1 // loop_body
      %s23 = ssub.s32 %s18, 1
      %s24 = ssub.s32 %s18, 2
      %s31 = sadd.s32 1, %s26
      %p32 = scmp.ge.s32.totalorder %s31, 1
      %s33 = scalar_select %p32, 0, %s31
      %s34 = sadd.s32 1, %s25
      %s35 = scalar_select %p32, %s34, %s25
      %p36 = scmp.ge.s32.totalorder %s35, 2
      %s37 = scalar_select %p36, 0, %s35
      %s38 = ssub.s32 %s25, %s37
      %s39 = ssub.s32 %s26, %s33
      %s40 = sor.u32 %s38, %s39
      %p41 = scmp.eq.s32.totalorder %s40, 0
      %s43 = sadd.s32 %s42, 1
      %s44 = scalar_select %p41, %s42, %s43
      %p47 = pneg %p41
      %p48 = scmp.eq.s32.totalorder %s18, 1
      %p49 = por %p47, %p48
      %p50 = scmp.ne.s32.totalorder %s42, %s45
      %p51 = scmp.eq.s32.totalorder %s18, 0
      %p52 = por %p50, %p51
      %p53 = scmp.ne.s32.totalorder %s42, %s45
      %p54 = scmp.eq.s32.totalorder %s23, 1
      %p55 = por %p53, %p54
      %p56 = scmp.ne.s32.totalorder %s45, %s46
      %p57 = scmp.eq.s32.totalorder %s23, 0
      %p58 = por %p56, %p57
      %p59 = scmp.ne.s32.totalorder %s45, %s46
      %p60 = scmp.eq.s32.totalorder %s24, 1
      %p61 = por %p59, %p60
      %p63 = scmp.ne.s32.totalorder %s46, %s62
      %p64 = scmp.eq.s32.totalorder %s24, 0
      %p65 = por %p63, %p64
      %s66 = ssub.s32 %s25, %s37
      %s67 = ssub.s32 %s26, %s33
      %s68 = sor.u32 %s66, %s67
      %p69 = scmp.eq.s32.totalorder %s68, 0
      %s71 = sadd.s32 %s70, 1
      %s72 = scalar_select %p69, %s70, %s71
      %p75 = pneg %p69
      %p76 = scmp.eq.s32.totalorder %s18, 1
      %p77 = por %p75, %p76
      %p78 = scmp.ne.s32.totalorder %s70, %s73
      %p79 = scmp.eq.s32.totalorder %s18, 0
      %p80 = por %p78, %p79
      %p81 = scmp.ne.s32.totalorder %s70, %s73
      %p82 = scmp.eq.s32.totalorder %s23, 1
      %p83 = por %p81, %p82
      %p84 = scmp.ne.s32.totalorder %s73, %s74
      %p85 = scmp.eq.s32.totalorder %s23, 0
      %p86 = por %p84, %p85
      %p87 = scmp.ne.s32.totalorder %s73, %s74
      %p88 = scmp.eq.s32.totalorder %s24, 1
      %p89 = por %p87, %p88
      %p91 = scmp.ne.s32.totalorder %s74, %s90
      %p92 = scmp.eq.s32.totalorder %s24, 0
      %p93 = por %p91, %p92
      %s94 = ssub.s32 %s25, %s37
      %s95 = ssub.s32 %s26, %s33
      %s96 = sor.u32 %s94, %s95
      %p97 = scmp.eq.s32.totalorder %s96, 0
      %s99 = sadd.s32 %s98, 1
      %s100 = scalar_select %p97, %s98, %s99
      %p103 = pneg %p97
      %p104 = scmp.eq.s32.totalorder %s18, 1
      %p105 = por %p103, %p104
      %p106 = scmp.ne.s32.totalorder %s98, %s101
      %p107 = scmp.eq.s32.totalorder %s18, 0
      %p108 = por %p106, %p107
      %p109 = scmp.ne.s32.totalorder %s98, %s101
      %p110 = scmp.eq.s32.totalorder %s23, 1
      %p111 = por %p109, %p110
      %p112 = scmp.ne.s32.totalorder %s101, %s102
      %p113 = scmp.eq.s32.totalorder %s23, 0
      %p114 = por %p112, %p113
      %p115 = scmp.ne.s32.totalorder %s101, %s102
      %p116 = scmp.eq.s32.totalorder %s24, 1
      %p117 = por %p115, %p116
      %p119 = scmp.ne.s32.totalorder %s102, %s118
      %p120 = scmp.eq.s32.totalorder %s24, 0
      %p121 = por %p119, %p120
      %s122 = ssub.s32 %s25, %s37
      %p123 = scmp.eq.s32.totalorder %s122, 0
      %s125 = sadd.s32 %s124, 1
      %s126 = scalar_select %p123, %s124, %s125
      %p129 = pneg %p123
      %p130 = scmp.eq.s32.totalorder %s18, 1
      %p131 = por %p129, %p130
      %p132 = scmp.ne.s32.totalorder %s124, %s127
      %p133 = scmp.eq.s32.totalorder %s18, 0
      %p134 = por %p132, %p133
      %p135 = scmp.ne.s32.totalorder %s124, %s127
      %p136 = scmp.eq.s32.totalorder %s23, 1
      %p137 = por %p135, %p136
      %p138 = scmp.ne.s32.totalorder %s127, %s128
      %p139 = scmp.eq.s32.totalorder %s23, 0
      %p140 = por %p138, %p139
      %p141 = scmp.ne.s32.totalorder %s127, %s128
      %p142 = scmp.eq.s32.totalorder %s24, 1
      %p143 = por %p141, %p142
      %p145 = scmp.ne.s32.totalorder %s128, %s144
      %p146 = scmp.eq.s32.totalorder %s24, 0
      %p147 = por %p145, %p146
      %p148 = scmp.le.s32.totalorder 1, %s18
      %p149 = scmp.lt.s32.totalorder %s18, 3
      %p150 = pnand %p148, %p149
      %p151 = pneg %p150
      // Predicated region
      $region9: #{tpu_custom_call.1} parent=5 // pred_check
        _
      $region10: #{tpu_custom_call.1} parent=5 // pred_check_branch
        %153 = sbr.rel (%p150) target = $region12
      $region11: #{tpu_custom_call.1} parent=5 // pred_region
        %s154 = ssub.s32 %s18, 1
      $region12: #{tpu_custom_call.1} parent=5 // pred_fallthru
        _
      %p155 = scmp.lt.s32.totalorder %s18, 2
      // Predicated region
      $region13: #{tpu_custom_call.1} parent=5 // pred_check
        %p156 = pneg %p155
      $region14: #{tpu_custom_call.1} parent=5 // pred_check_branch
        %158 = sbr.rel (%p156) target = $region16
      $region15: #{tpu_custom_call.1} parent=5 // pred_region
        // Predicated region
        $region17: #{tpu_custom_call.1} parent=15 // pred_check
          %p159 = pneg %p52
        $region18: #{tpu_custom_call.1} parent=15 // pred_check_branch
          %161 = sbr.rel (%p159) target = $region20
        $region19: #{tpu_custom_call.1} parent=15 // pred_region
          %s162 = sand.u32 %s42, 1
          %s163 = scalar_lea.sflag [#allocation5], %s162
          %s164 = sand.u32 %s42, 1
          %s165 = smul.addr %s164, 8
          %s166 = scalar_lea.vmem [#allocation4], %s165
          %s167 = smul.u32 2, %s26
          %s169 = ssub.s32 128, 128
          %170 = vsyncadd %s163, %s169
          %s171 = smul.addr %s25, 2
          %s172 = sadd.s32 %s167, %s171
          %s173 = smul.addr %s172, 64
          %s174 = scalar_lea.hbm %s0, %s173
          %s176 = sshll.u32 %s166, 4
          %s177 = int_to_ptr.vmem [resolvable:$true] %s176
          %179 = dma.hbm_to_vmem [thread:$0]  %s174, 128, %s177, %s163
        $region20: #{tpu_custom_call.1} parent=15 // pred_fallthru
          _
        // Predicated region
        $region21: #{tpu_custom_call.1} parent=15 // pred_check
          %p180 = pneg %p80
        $region22: #{tpu_custom_call.1} parent=15 // pred_check_branch
          %182 = sbr.rel (%p180) target = $region24
        $region23: #{tpu_custom_call.1} parent=15 // pred_region
          %s183 = sand.u32 %s70, 1
          %s184 = scalar_lea.sflag [#allocation8], %s183
          %s185 = sand.u32 %s70, 1
          %s186 = smul.addr %s185, 8
          %s187 = scalar_lea.vmem [#allocation7], %s186
          %s188 = smul.u32 2, %s26
          %s190 = ssub.s32 128, 128
          %191 = vsyncadd %s184, %s190
          %s192 = smul.addr %s25, 2
          %s193 = sadd.s32 %s188, %s192
          %s194 = smul.addr %s193, 64
          %s195 = scalar_lea.hbm %s1, %s194
          %s197 = sshll.u32 %s187, 4
          %s198 = int_to_ptr.vmem [resolvable:$true] %s197
          %200 = dma.hbm_to_vmem [thread:$0]  %s195, 128, %s198, %s184
        $region24: #{tpu_custom_call.1} parent=15 // pred_fallthru
          _
        // Predicated region
        $region25: #{tpu_custom_call.1} parent=15 // pred_check
          %p201 = pneg %p108
        $region26: #{tpu_custom_call.1} parent=15 // pred_check_branch
          %203 = sbr.rel (%p201) target = $region28
        $region27: #{tpu_custom_call.1} parent=15 // pred_region
          %s204 = smul.u32 2, %s26
          %p205 = scmp.lt.s32.totalorder %s25, 1
          %s206 = scalar_select %p205, %s25, 1
          %p207 = scmp.lt.s32.totalorder %s204, 1
          %s208 = scalar_select %p207, %s204, 1
          %s209 = smul.addr %s206, 2
          %s210 = sadd.s32 %s208, %s209
          %s211 = scalar_lea.vmem %s2, %s210
          %s212 = smul.u32 2, %s26
        $region28: #{tpu_custom_call.1} parent=15 // pred_fallthru
          _
      $region16: #{tpu_custom_call.1} parent=5 // pred_fallthru
        _
      %p213 = scmp.le.s32.totalorder 1, %s18
      %p214 = scmp.lt.s32.totalorder %s18, 3
      %p215 = pnand %p213, %p214
      %p216 = pneg %p215
      // Predicated region
      $region29: #{tpu_custom_call.1} parent=5 // pred_check
        _
      $region30: #{tpu_custom_call.1} parent=5 // pred_check_branch
        %218 = sbr.rel (%p215) target = $region32
      $region31: #{tpu_custom_call.1} parent=5 // pred_region
        %s219 = ssub.s32 %s18, 1
        %s220 = sand.u32 %s45, 1
        %s221 = scalar_lea.sflag [#allocation5], %s220
        %s222 = sand.u32 %s45, 1
        %s223 = smul.addr %s222, 8
        %s224 = scalar_lea.vmem [#allocation4], %s223
        // Predicated region
        $region33: #{tpu_custom_call.1} parent=31 // pred_check
          %p225 = pneg %p58
        $region34: #{tpu_custom_call.1} parent=31 // pred_check_branch
          %227 = sbr.rel (%p225) target = $region36
        $region35: #{tpu_custom_call.1} parent=31 // pred_region
          %228 = dma.done %s221, 128
        $region36: #{tpu_custom_call.1} parent=31 // pred_fallthru
          _
        %s229 = sand.u32 %s73, 1
        %s230 = scalar_lea.sflag [#allocation8], %s229
        %s231 = sand.u32 %s73, 1
        %s232 = smul.addr %s231, 8
        %s233 = scalar_lea.vmem [#allocation7], %s232
        // Predicated region
        $region37: #{tpu_custom_call.1} parent=31 // pred_check
          %p234 = pneg %p86
        $region38: #{tpu_custom_call.1} parent=31 // pred_check_branch
          %236 = sbr.rel (%p234) target = $region40
        $region39: #{tpu_custom_call.1} parent=31 // pred_region
          %237 = dma.done %s230, 128
        $region40: #{tpu_custom_call.1} parent=31 // pred_fallthru
          _
        %s238 = sand.u32 %s45, 1
        %s239 = scalar_lea.sflag [#allocation5], %s238
        %s240 = sand.u32 %s45, 1
        %s241 = smul.addr %s240, 8
        %s242 = scalar_lea.vmem [#allocation4], %s241
        %p243 = pneg %p58
        %p244 = pneg %p55
        %s245 = sand.u32 %s73, 1
        %s246 = scalar_lea.sflag [#allocation8], %s245
        %s247 = sand.u32 %s73, 1
        %s248 = smul.addr %s247, 8
        %s249 = scalar_lea.vmem [#allocation7], %s248
        %p250 = pneg %p86
        %p251 = pneg %p83
        %s252 = smul.u32 2, %s28
        %p253 = scmp.lt.s32.totalorder %s27, 1
        %s254 = scalar_select %p253, %s27, 1
        %p255 = scmp.lt.s32.totalorder %s252, 1
        %s256 = scalar_select %p255, %s252, 1
        %s257 = smul.addr %s254, 2
        %s258 = sadd.s32 %s256, %s257
        %s259 = scalar_lea.vmem %s2, %s258
        %p260 = pneg %p114
        %p261 = pneg %p111
        %p262 = pneg %p140
        %p263 = pneg %p137
        %s264 = sand.u32 %s127, 1
        %s265 = scalar_lea.sflag [#allocation6], %s264
        %s266 = sand.u32 %s127, 1
        %s267 = smul.addr %s266, 8
        %s268 = scalar_lea.vmem [#allocation9], %s267
        %s269 = smul.u32 2, %s28
        %s270 = smul.u32 2, %s28
        %s271 = smul.u32 2, %s28
        %p272 = scmp.lt.s32.totalorder %s27, 1
        %s273 = scalar_select %p272, %s27, 1
        %p274 = scmp.lt.s32.totalorder %s271, 1
        %s275 = scalar_select %p274, %s271, 1
        %s276 = smul.addr %s273, 2
        %s277 = sadd.s32 %s275, %s276
        %s278 = scalar_lea.vmem %s2, %s277
        %s279 = smul.u32 2, %s28
        %p280 = scmp.eq.s32.totalorder %s28, 0
        // Predicated region
        $region41: #{tpu_custom_call.1} parent=31 // pred_check
          %p281 = pneg %p280
        $region42: #{tpu_custom_call.1} parent=31 // pred_check_branch
          %283 = sbr.rel (%p281) target = $region44
        $region43: #{tpu_custom_call.1} parent=31 // pred_region
          %v284 = vlaneseq
          %vm285 = vcmp.ge.s32.totalorder %v284, 0
          %vm286 = vcmp.lt.s32.totalorder %v284, 256
          %vm287 = vmand %vm285, %vm286
          %288 = vst.msk [vmem:[#allocation2] sm:$0x3] %vm287, 0.0
          %289 = vst.msk [vmem:[#allocation3] sm:$0x3] %vm287, 0.0
        $region44: #{tpu_custom_call.1} parent=31 // pred_fallthru
          _
        %v290 = vld [vmem:[%s224] sm:$0xff]
        %v291 = vld [vmem:[%s233] sm:$0xff]
        %v292 = vsub.f32 %v290, %v291
        %v293 = vld [vmem:[%s278] sm:$0x3]
        %v294 = vmul.f32 %v292, %v292
        %v296 = vcombine.high %v294, %v294
        %vm298 = vcmask 1043456
        %v299 = vsel %vm298, %v294, 0.0
        %v300 = vrot.slane %v299, 4
        %v301 = vadd.f32 %v299, %v300
        %v302 = vrot.slane %v301, 2
        %v303 = vadd.f32 %v301, %v302
        %v304 = vrot.slane %v303, 1
        %v305 = vadd.f32 %v303, %v304
        %v306 = vsel %vm298, %v296, 0.0
        %v307 = vrot.slane %v306, 4
        %v308 = vadd.f32 %v306, %v307
        %v309 = vrot.slane %v308, 2
        %v310 = vadd.f32 %v308, %v309
        %v311 = vrot.slane %v310, 1
        %v312 = vadd.f32 %v310, %v311
        %v313 = vld [vmem:[#allocation2] sm:$0x3]
        %v315 = vlaneseq
        %v316 = vshrl.u32 %v315, 7
        %v317 = vsub.s32 0, %v316
        %v318 = vrot.slane %v293, %v317
        %v319 = vlaneseq
        %v320 = vshrl.u32 %v319, 7
        %v321 = vsub.s32 1, %v320
        %v322 = vrot.slane %v293, %v321
        %v325 = vmul.f32 %v305, %v318
        %v326 = vmul.f32 %v312, %v322
        %v329 = vcombine.low %v325, %v326
        %v331 = vunpack.c.l.s4 1966171168
        %v332 = vunpack.c.0.s8 %v331
        %v333 = vlaneseq
        %v334 = vshrl.u32 %v333, 7
        %v335 = vsub.s32 %v332, %v334
        %v336 = vrot.slane %v329, %v335
        %v338 = vunpack.c.l.s4 1966171168
        %v339 = vunpack.c.0.s8 %v338
        %v340 = vlaneseq
        %v341 = vshrl.u32 %v340, 7
        %v342 = vsub.s32 %v339, %v341
        %v343 = vrot.slane %v336, %v342
        %v345 = vadd.f32 %v313, %v343
        %v346 = vlaneseq
        %vm347 = vcmp.ge.s32.totalorder %v346, 0
        %vm348 = vcmp.lt.s32.totalorder %v346, 256
        %vm349 = vmand %vm347, %vm348
        %350 = vst.msk [vmem:[#allocation2] sm:$0x3] %vm349, %v345
        %v351 = vld [vmem:[#allocation3] sm:$0x3]
        %v352 = vadd.f32 %v351, %v293
        %353 = vst.msk [vmem:[#allocation3] sm:$0x3] %vm349, %v352
        // Predicated region
        $region45: #{tpu_custom_call.1} parent=31 // pred_check
          %p354 = pneg %p280
        $region46: #{tpu_custom_call.1} parent=31 // pred_check_branch
          %356 = sbr.rel (%p354) target = $region48
        $region47: #{tpu_custom_call.1} parent=31 // pred_region
          %v357 = vld [vmem:[#allocation2] sm:$0x3]
          %v359 = vlaneseq
          %v360 = vshrl.u32 %v359, 7
          %v361 = vsub.s32 0, %v360
          %v362 = vrot.slane %v357, %v361
          %v363 = vlaneseq
          %v364 = vshrl.u32 %v363, 7
          %v365 = vsub.s32 1, %v364
          %v366 = vrot.slane %v357, %v365
          %vm369 = vcmask 1040384
          %v370 = vsel %vm369, %v362, 0.0
          %v371 = vsel %vm369, %v366, 0.0
          %v372 = vadd.f32 %v370, %v371
          %373 = vadd.xlane.f32.xlu0 %v372
          %v374 = vpop.xlane.xlu0 %373
          %v375 = vrot.slane %v374, 4
          %v376 = vadd.f32 %v374, %v375
          %v377 = vrot.slane %v376, 2
          %v378 = vadd.f32 %v376, %v377
          %v379 = vrot.slane %v378, 1
          %v380 = vadd.f32 %v378, %v379
          %s381 = vtos %v380
          %v382 = vld [vmem:[#allocation3] sm:$0x3]
          %v384 = vlaneseq
          %v385 = vshrl.u32 %v384, 7
          %v386 = vsub.s32 0, %v385
          %v387 = vrot.slane %v382, %v386
          %v388 = vlaneseq
          %v389 = vshrl.u32 %v388, 7
          %v390 = vsub.s32 1, %v389
          %v391 = vrot.slane %v382, %v390
          %v394 = vsel %vm369, %v387, 0.0
          %v395 = vsel %vm369, %v391, 0.0
          %v396 = vadd.f32 %v394, %v395
          %397 = vadd.xlane.f32.xlu0 %v396
          %v398 = vpop.xlane.xlu0 %397
          %v399 = vrot.slane %v398, 4
          %v400 = vadd.f32 %v398, %v399
          %v401 = vrot.slane %v400, 2
          %v402 = vadd.f32 %v400, %v401
          %v403 = vrot.slane %v402, 1
          %v404 = vadd.f32 %v402, %v403
          %s405 = vtos %v404
          %v406 = vlaneseq
          %v407 = vshrl.u32 %v406, 7
          %v408 = vlaneseq
          %v409 = vand.u32 %v408, 127
          %vm410 = vcmp.eq.s32.totalorder %v407, 0
          %vm411 = vcmp.eq.s32.totalorder %v409, 0
          %vm412 = vmand %vm410, %vm411
          %vm413 = vcmp.eq.s32.totalorder %v407, 1
          %vm414 = vmand %vm413, %vm411
          %v415 = vstv %s405
          %v416 = vsel %vm414, %v415, 0.0
          %v417 = vstv %s381
          %v418 = vsel %vm412, %v417, %v416
          %419 = vst [vmem:[%s268] sm:$0xff] %v418
        $region48: #{tpu_custom_call.1} parent=31 // pred_fallthru
          _
        %s420 = sand.u32 %s127, 1
        %s421 = scalar_lea.sflag [#allocation6], %s420
        %s422 = sand.u32 %s127, 1
        %s423 = smul.addr %s422, 8
        %s424 = scalar_lea.vmem [#allocation9], %s423
        // Predicated region
        $region49: #{tpu_custom_call.1} parent=31 // pred_check
          %p425 = pneg %p137
        $region50: #{tpu_custom_call.1} parent=31 // pred_check_branch
          %427 = sbr.rel (%p425) target = $region52
        $region51: #{tpu_custom_call.1} parent=31 // pred_region
          %s429 = ssub.s32 128, 128
          %430 = vsyncadd %s421, %s429
          %s431 = smul.addr %s27, 128
          %s432 = scalar_lea.hbm %s3, %s431
          %s434 = sshll.u32 %s424, 4
          %s435 = int_to_ptr.vmem [resolvable:$true] %s434
          %437 = dma.vmem_to_hbm [thread:$0]  %s435, 128, %s432, %s421
        $region52: #{tpu_custom_call.1} parent=31 // pred_fallthru
          _
      $region32: #{tpu_custom_call.1} parent=5 // pred_fallthru
        _
      %p438 = scmp.le.s32.totalorder 2, %s18
      // Predicated region
      $region53: #{tpu_custom_call.1} parent=5 // pred_check
        %p439 = pneg %p438
      $region54: #{tpu_custom_call.1} parent=5 // pred_check_branch
        %441 = sbr.rel (%p439) target = $region56
      $region55: #{tpu_custom_call.1} parent=5 // pred_region
        %s442 = ssub.s32 %s18, 2
        // Predicated region
        $region57: #{tpu_custom_call.1} parent=55 // pred_check
          %p443 = pneg %p143
        $region58: #{tpu_custom_call.1} parent=55 // pred_check_branch
          %445 = sbr.rel (%p443) target = $region60
        $region59: #{tpu_custom_call.1} parent=55 // pred_region
          %s446 = sand.u32 %s128, 1
          %s447 = scalar_lea.sflag [#allocation6], %s446
          %s448 = sand.u32 %s128, 1
          %s449 = smul.addr %s448, 8
          %s450 = scalar_lea.vmem [#allocation9], %s449
          %451 = dma.done %s447, 128
        $region60: #{tpu_custom_call.1} parent=55 // pred_fallthru
          _
      $region56: #{tpu_custom_call.1} parent=5 // pred_fallthru
        _
    $region6: #{tpu_custom_call.1} parent=1 // loop_footer
      %s22 = sadd.s32 1, %s18
    $region7: #{tpu_custom_call.1} parent=1 // loop_footer_branch
      %17 = sbr.rel target = $region3
    $region8: #{tpu_custom_call.1} parent=1 // loop_exit
      _
    %452 = vsyncpa [#allocation5], 1
    %s453 = scalar_lea.sflag [#allocation5], 1
    %454 = vsyncpa %s453, 1
    %455 = vsyncpa [#allocation8], 1
    %s456 = scalar_lea.sflag [#allocation8], 1
    %457 = vsyncpa %s456, 1
    %458 = vsyncpa [#allocation6], 1
    %s459 = scalar_lea.sflag [#allocation6], 1
    %460 = vsyncpa %s459, 1

</llo_original>
